<compile_context>
chip_gen: v7x
topology: tpu7x:2x2x1
jax: 0.10.0
libtpu: 0.0.40
codegen_flags: <defaults>
</compile_context>

<pallas_src>
import math

import jax
import jax.numpy as jnp
from jax.experimental import pallas as pl
from jax.experimental.pallas import tpu as pltpu


VMEM_LIMIT_BYTES = 48 * 1024 * 1024   # > the 16/32 MiB scoped defaults on v5e / v6e-v7x,
                                      # < v7x's 64 MiB physical VMEM.
RECURRENT_UNROLL = 8                  # inner-loop unroll, decoupled from t_block


# ---------------------------------------------------------------------------
# Row-tiled dense (matmul + bias) kernel: hoisted input projection.
# ---------------------------------------------------------------------------
def dense_kernel(x_ref, w_ref, b_ref, o_ref):
    o_ref[...] = (jnp.dot(x_ref[...], w_ref[...],
                          preferred_element_type=jnp.float32)
                  + b_ref[...])


def dense(x2d, w, b, *, block_rows=512, vmem_limit_bytes=VMEM_LIMIT_BYTES):
    m, k = x2d.shape
    n = w.shape[1]
    bm = min(block_rows, m)            # either == m (full dim) or 512 (mult. of 8)
    m_pad = -(-m // bm) * bm
    if m_pad != m:
        x2d = jnp.pad(x2d, ((0, m_pad - m), (0, 0)))
    out = pl.pallas_call(
        dense_kernel,
        out_shape=jax.ShapeDtypeStruct((m_pad, n), jnp.float32),
        grid_spec=pltpu.PrefetchScalarGridSpec(
            num_scalar_prefetch=0,
            grid=(m_pad // bm,),
            in_specs=[pl.BlockSpec((bm, k), lambda i: (i, 0)),
                      pl.BlockSpec((k, n), lambda i: (0, 0)),
                      pl.BlockSpec((1, n), lambda i: (0, 0))],
            out_specs=pl.BlockSpec((bm, n), lambda i: (i, 0))),
        compiler_params=pltpu.CompilerParams(
            dimension_semantics=("parallel",),
            vmem_limit_bytes=vmem_limit_bytes),
    )(x2d, w, b)
    return out[:m] if m_pad != m else out


# ---------------------------------------------------------------------------
# Recurrent kernel: one grid iteration == t_block RNN time steps.  Grid is
# (batch_shards, time_blocks); time axis is sequential ("arbitrary"), hidden
# state is carried across time blocks in VMEM scratch.  The fc head is fused
# per step (independent of the carry chain -> fills idle MXU slots).
# ---------------------------------------------------------------------------
def flipflop_recurrent_kernel(xzc_ref, wzw_ref, wfc_ref, bfc_ref,
                              hid_ref, out_ref, r_state):
    # xzc_ref: (tb, Bs, 2H)  precomputed x-projections with biases folded in
    # wzw_ref: (H, 2H)       fused recurrent weights [W_z^T | W^T]
    # wfc_ref: (H, C), bfc_ref: (1, C)   fc head
    # hid_ref: (tb, Bs, H)   hidden states for this block (time-major)
    # out_ref: (tb, Bs, C)   fc outputs for this block
    # r_state: VMEM (Bs, H)  recurrent state, persists across time blocks
    H = r_state.shape[-1]
    n_steps = hid_ref.shape[0]

    @pl.when(pl.program_id(1) == 0)
    def _():
        # FlipFlop.forward initializes r_t to zeros for every batch shard
        r_state[...] = jnp.zeros_like(r_state)

    # grid-invariant weights: read once per block, resident in vregs/VMEM
    w = wzw_ref[...]
    wfc = wfc_ref[...]
    bfc = bfc_ref[...]

    def step(s, r):
        xz = xzc_ref[s]                                        # (Bs, 2H)
        pre = jnp.dot(r, w, preferred_element_type=jnp.float32) + xz
        g = jax.nn.sigmoid(pre)                                # one EUP pass, (Bs, 2H)
        z = g[:, :H]                                           # update gate
        cand = g[:, H:]                                        # candidate
        r_new = r + z * (cand - r)                             # == (1-z)*r + z*cand
        hid_ref[pl.ds(s, 1)] = r_new[None]
        # fc head: off the serial carry chain, overlaps with the next step
        out_ref[pl.ds(s, 1)] = (jnp.dot(r_new, wfc,
                                        preferred_element_type=jnp.float32)
                                + bfc)[None]
        return r_new

    r_final = jax.lax.fori_loop(0, n_steps, step, r_state[...],
                                unroll=min(RECURRENT_UNROLL, n_steps))
    r_state[...] = r_final


def flipflop_forward(x_btd, params, t_block=None, batch_shards=1,
                     vmem_limit_bytes=VMEM_LIMIT_BYTES):
    """x_btd: (B, T, input_size) float32.  Returns dict(output, hidden)."""
    B, T, I = x_btd.shape
    H = params['W'].shape[0]
    C = params['fc_w'].shape[0]

    x_btd = x_btd.astype(jnp.float32)

    # -- static weight prep (hoisted out of the kernels) ---------------------
    row_mask = (jnp.arange(H)[:, None] < H // 2)
    P_m = jnp.where(row_mask, params['P'], 0.0)                          # (H, I)
    p_cat = jnp.concatenate([params['P_z'].T, P_m.T], axis=1)           # (I, 2H)
    b_cat = jnp.concatenate([params['b_z'].T, params['b_v'].T], axis=1)  # (1, 2H)
    w_cat = jnp.concatenate([params['W_z'].T, params['W'].T], axis=1)   # (H, 2H)
    wfc_t = params['fc_w'].T                                            # (H, C)
    bfc = params['fc_b'].reshape(1, C)                                  # (1, C)

    # -- batch sharding (2nd TensorCore on v7x); only when layout stays legal --
    if batch_shards > 1 and (B % batch_shards != 0
                             or (B // batch_shards) % 8 != 0):
        batch_shards = 1
    Bs = B // batch_shards

    # -- time-block size from the VMEM budget (decoupled from unroll) --------
    if t_block is None:
        # double-buffered xzc block + hid/out blocks, f32
        bytes_per_step = 2 * Bs * (2 * H + H + C) * 4
        t_block = max(8, min(512, (vmem_limit_bytes // 2) // max(bytes_per_step, 1)))
    tb = max(1, min(t_block, T))
    T_pad = -(-T // tb) * tb

    # -- pad the RAW input (I lanes) on time, then project all steps at once --
    x_tbi = jnp.transpose(x_btd, (1, 0, 2))                             # (T, B, I), tiny
    if T_pad != T:
        # padded steps compute junk that is sliced off (forward recurrence only)
        x_tbi = jnp.pad(x_tbi, ((0, T_pad - T), (0, 0), (0, 0)))
    xzc = dense(x_tbi.reshape(T_pad * B, I), p_cat, b_cat,
                vmem_limit_bytes=vmem_limit_bytes).reshape(T_pad, B, 2 * H)

    # -- time-blocked sequential recurrence with fused fc head ---------------
    hid, out = pl.pallas_call(
        flipflop_recurrent_kernel,
        out_shape=(jax.ShapeDtypeStruct((T_pad, B, H), jnp.float32),
                   jax.ShapeDtypeStruct((T_pad, B, C), jnp.float32)),
        grid_spec=pltpu.PrefetchScalarGridSpec(
            num_scalar_prefetch=0,
            grid=(batch_shards, T_pad // tb),
            in_specs=[pl.BlockSpec((tb, Bs, 2 * H), lambda b, t: (t, b, 0)),
                      pl.BlockSpec((H, 2 * H), lambda b, t: (0, 0)),
                      pl.BlockSpec((H, C), lambda b, t: (0, 0)),
                      pl.BlockSpec((1, C), lambda b, t: (0, 0))],
            out_specs=[pl.BlockSpec((tb, Bs, H), lambda b, t: (t, b, 0)),
                       pl.BlockSpec((tb, Bs, C), lambda b, t: (t, b, 0))],
            scratch_shapes=[pltpu.VMEM((Bs, H), jnp.float32)]),
        compiler_params=pltpu.CompilerParams(
            dimension_semantics=("parallel", "arbitrary"),
            vmem_limit_bytes=vmem_limit_bytes),
    )(xzc, w_cat, wfc_t, bfc)

    hid = hid[:T]                                                       # (T, B, H)
    out = out[:T]                                                       # (T, B, C)

    # back to the PyTorch batch-first convention
    hidden_bth = jnp.transpose(hid, (1, 0, 2))
    output_btc = jnp.transpose(out, (1, 0, 2))
    return {'output': output_btc, 'hidden': hidden_bth}


def reference_forward(x_btd, params):
    """Pure-JAX reference mirroring the PyTorch module exactly."""
    B, T, I = x_btd.shape
    H = params['W'].shape[0]
    row_mask = (jnp.arange(H)[:, None] < H // 2)
    P_m = jnp.where(row_mask, params['P'], 0.0)
    r = jnp.zeros((B, H), jnp.float32)
    hs = []
    for t in range(T):
        x_t = x_btd[:, t, :]
        z = jax.nn.sigmoid(r @ params['W_z'].T + x_t @ params['P_z'].T
                           + params['b_z'].T)
        cand = jax.nn.sigmoid(r @ params['W'].T + x_t @ P_m.T
                              + params['b_v'].T)
        r = (1.0 - z) * r + z * cand
        hs.append(r)
    hidden = jnp.stack(hs, axis=1)
    out = hidden @ params['fc_w'].T + params['fc_b']
    return {'output': out, 'hidden': hidden}


def init_params(key, input_size, hidden_size, num_classes):
    """Deterministic init matching the module's uniform(-1/sqrt(H), 1/sqrt(H))."""
    bound = 1.0 / math.sqrt(hidden_size)
    keys = jax.random.split(key, 8)
    u = lambda k, shape: jax.random.uniform(k, shape, jnp.float32, -bound, bound)
    return {
        'W':    u(keys[0], (hidden_size, hidden_size)),
        'P':    u(keys[1], (hidden_size, input_size)),
        'b_v':  u(keys[2], (hidden_size, 1)),
        'W_z':  u(keys[3], (hidden_size, hidden_size)),
        'P_z':  u(keys[4], (hidden_size, input_size)),
        'b_z':  u(keys[5], (hidden_size, 1)),
        'fc_w': u(keys[6], (num_classes, hidden_size)),
        'fc_b': u(keys[7], (num_classes,)),
    }


# TODO(synk): the training loop / Adam / LR scheduler / Dataset / DataLoader /
# MSE-loss / plotting machinery of the PyTorch file is host-side orchestration
# and is not translated to kernels.

if __name__ == "__main__":
    B, T, INPUT, HIDDEN, CLASSES = 2, 20, 3, 32, 3

    key = jax.random.PRNGKey(0)
    k_params, k_x = jax.random.split(key)
    params = init_params(k_params, INPUT, HIDDEN, CLASSES)
    # flip-flop style inputs in {-1, 0, +1}
    x = jax.random.randint(k_x, (B, T, INPUT), -1, 2).astype(jnp.float32)

    ref = reference_forward(x, params)

    # t_block=8 -> T padded 20 -> 24, 3 sequential time blocks: exercises
    # state carry-over across grid steps and the padded-tail slicing.
    pred_blocked = flipflop_forward(x, params, t_block=8)
    jax.block_until_ready(pred_blocked)
    assert jnp.allclose(pred_blocked['hidden'], ref['hidden'], atol=1e-5, rtol=1e-5)
    assert jnp.allclose(pred_blocked['output'], ref['output'], atol=1e-5, rtol=1e-5)

    # default (VMEM-budget-derived) t_block -> single time block.
    pred_default = flipflop_forward(x, params)
    jax.block_until_ready(pred_default)
    assert jnp.allclose(pred_default['hidden'], ref['hidden'], atol=1e-5, rtol=1e-5)
    assert jnp.allclose(pred_default['output'], ref['output'], atol=1e-5, rtol=1e-5)

    print("KERNEL_OK")
</pallas_src>

<mosaic_0001>
module attributes {stable_mosaic.version = 11 : i64} {
  func.func @dense_kernel(%arg0: i32, %arg1: memref<48x3xf32, #tpu.memory_space<vmem>>, %arg2: memref<3x64xf32, #tpu.memory_space<vmem>>, %arg3: memref<1x64xf32, #tpu.memory_space<vmem>>, %arg4: memref<48x64xf32, #tpu.memory_space<vmem>>) attributes {dimension_semantics = [#tpu.dimension_semantics<parallel>], iteration_bounds = array<i64: 1>, scalar_prefetch = 0 : i64, scratch_operands = 0 : i64, tpu.core_type = #tpu.core_type<tc>, window_params = [{transform_indices = @transform_0, window_bounds = array<i64: 48, 3>}, {pipeline_mode = #tpu.pipeline_mode<synchronous>, transform_indices = @transform_1, window_bounds = array<i64: 3, 64>}, {pipeline_mode = #tpu.pipeline_mode<synchronous>, transform_indices = @transform_2, window_bounds = array<i64: 1, 64>}, {transform_indices = @transform_3, window_bounds = array<i64: 48, 64>}]} {
    %c0 = arith.constant 0 : index
    %c0_0 = arith.constant 0 : index
    %0 = vector.load %arg1[%c0, %c0_0] : memref<48x3xf32, #tpu.memory_space<vmem>>, vector<48x3xf32>
    %c0_1 = arith.constant 0 : index
    %c0_2 = arith.constant 0 : index
    %1 = vector.load %arg2[%c0_1, %c0_2] : memref<3x64xf32, #tpu.memory_space<vmem>>, vector<3x64xf32>
    %cst = arith.constant dense<0.000000e+00> : vector<48x64xf32>
    %2 = tpu.matmul %0, %1, %cst {dimension_numbers = #tpu.dot_dimension_numbers<[1], [0], [0], [1], [0, 0, 1, 1], [], []>} : vector<48x3xf32>, vector<3x64xf32>, vector<48x64xf32> -> vector<48x64xf32>
    %c0_3 = arith.constant 0 : index
    %c0_4 = arith.constant 0 : index
    %3 = vector.load %arg3[%c0_3, %c0_4] : memref<1x64xf32, #tpu.memory_space<vmem>>, vector<1x64xf32>
    %4 = vector.broadcast %3 : vector<1x64xf32> to vector<48x64xf32>
    %5 = arith.addf %2, %4 : vector<48x64xf32>
    %c0_5 = arith.constant 0 : index
    %c0_6 = arith.constant 0 : index
    %6 = vector.load %arg4[%c0_5, %c0_6] : memref<48x64xf32, #tpu.memory_space<vmem>>, vector<48x64xf32>
    tpu.vector_store %arg4[%c0_5, %c0_6], %5 {strides = array<i32>} : memref<48x64xf32, #tpu.memory_space<vmem>>, vector<48x64xf32>,
    return
  }
  func.func @transform_0(%arg0: i32) -> (i32, i32) {
    %c0_i32 = arith.constant 0 : i32
    %c0_i32_0 = arith.constant 0 : i32
    return %arg0, %c0_i32 : i32, i32
  }
  func.func @transform_1(%arg0: i32) -> (i32, i32) {
    %c0_i32 = arith.constant 0 : i32
    %c0_i32_0 = arith.constant 0 : i32
    %c0_i32_1 = arith.constant 0 : i32
    return %c0_i32, %c0_i32_0 : i32, i32
  }
  func.func @transform_2(%arg0: i32) -> (i32, i32) {
    %c0_i32 = arith.constant 0 : i32
    %c0_i32_0 = arith.constant 0 : i32
    %c0_i32_1 = arith.constant 0 : i32
    return %c0_i32, %c0_i32_0 : i32, i32
  }
  func.func @transform_3(%arg0: i32) -> (i32, i32) {
    %c0_i32 = arith.constant 0 : i32
    %c0_i32_0 = arith.constant 0 : i32
    return %arg0, %c0_i32 : i32, i32
  }
}

</mosaic_0001>

<llo_original>
// kernel: tpu_custom_call.1
$region0: #{tpu_custom_call.1}
  #allocation0 [shape = 'u32[]', space=smem, size = 0x4, offset = 0x4, fixed_abs, tag = 'smem constant byte address 0x4 - core index']
  #allocation1 [shape = 'u32[144,128]{1,0:T(1,128)}', space=vmem, size = 0x12000, scoped, tag = 'internal scratch']
  %s0 = inlined_call_operand.vmem [shape: f32[48,3], index: 0, kind: input, shape index: {}]
  %s1 = inlined_call_operand.vmem [shape: f32[3,64], index: 1, kind: input, shape index: {}]
  %s2 = inlined_call_operand.vmem [shape: f32[1,64], index: 2, kind: input, shape index: {}]
  %s3 = inlined_call_operand.hbm [shape: f32[48,64], index: 3, kind: output, shape index: {}]
  %s4 = sld [smem:[#allocation0]]
  $region22: #{tpu_custom_call.1} parent=0
    _
  %s6 = ssub.s32 1, %s4
  %s7 = scalar_select 0, %s6, %s4
  $region1: #{tpu_custom_call.1} parent=0
    #allocation2 [shape = 'u8[24576]{0}', space=vmem, size = 0x6000, scoped, tag = 'output window, operand 0, single buffered']
    #allocation3 [shape = 's32[1]{0}', space=sflag, size = 0x4, scoped, tag = 'scoped memory for tpu_custom_call.1']
    %8 = vsyncpa [#allocation3], 0
    // Predicated region
    $region2: #{tpu_custom_call.1} parent=1 // pred_check
      _
    $region3: #{tpu_custom_call.1} parent=1 // pred_check_branch
      %10 = sbr.rel (0) target = $region5
    $region4: #{tpu_custom_call.1} parent=1 // pred_region
      _
    $region5: #{tpu_custom_call.1} parent=1 // pred_fallthru
      _
    // Predicated region
    $region6: #{tpu_custom_call.1} parent=1 // pred_check
      _
    $region7: #{tpu_custom_call.1} parent=1 // pred_check_branch
      %12 = sbr.rel (0) target = $region9
    $region8: #{tpu_custom_call.1} parent=1 // pred_region
      _
    $region9: #{tpu_custom_call.1} parent=1 // pred_fallthru
      _
    // Predicated region
    $region10: #{tpu_custom_call.1} parent=1 // pred_check
      _
    $region11: #{tpu_custom_call.1} parent=1 // pred_check_branch
      %14 = sbr.rel (0) target = $region13
    $region12: #{tpu_custom_call.1} parent=1 // pred_region
      _
    $region13: #{tpu_custom_call.1} parent=1 // pred_fallthru
      _
    %v15 = vld [vmem:[%s0] sm:$0xff]
    %v16 = vld [vmem:[%s0 + $0x8] sm:$0xff]
    %v17 = vld [vmem:[%s0 + $0x10] sm:$0xff]
    %v18 = vld [vmem:[%s0 + $0x18] sm:$0xff]
    %v19 = vld [vmem:[%s0 + $0x20] sm:$0xff]
    %v20 = vld [vmem:[%s0 + $0x28] sm:$0xff]
    %v21 = vld [vmem:[%s1] sm:$0x7]
    %v22 = vld [vmem:[%s2] sm:$0x1]
    %v24 = vlaneseq
    %v25 = vshrl.u32 %v24, 7
    %v26 = vsub.s32 0, %v25
    %v27 = vrot.slane %v22, %v26
    %vm29 = vcmask 23552
    %v31 = vsel %vm29, %v15, 0
    %v34 = vsel %vm29, %v16, 0
    %v37 = vsel %vm29, %v17, 0
    %v40 = vsel %vm29, %v18, 0
    %v43 = vsel %vm29, %v19, 0
    %v46 = vsel %vm29, %v20, 0
    %vm48 = vcmask 1042432
    %v50 = vsel %vm48, %v21, 0
    %52 = vmatprep.subr.mxu0 0.0
    %53 = vmatpush1.msra.mxu0 %v50
    %54 = vmatprep.subr.mxu0 0.0
    %55 = vmatpush1.msra.mxu0 0.0
    %56 = vmatprep.subr.mxu0 0.0
    %57 = vmatpush1.msra.mxu0 0.0
    %58 = vmatprep.subr.mxu0 0.0
    %59 = vmatpush1.msra.mxu0 0.0
    %60 = vmatprep.subr.mxu0 0.0
    %61 = vmatpush1.msra.mxu0 0.0
    %62 = vmatprep.subr.mxu0 0.0
    %63 = vmatpush1.msra.mxu0 0.0
    %64 = vmatprep.subr.mxu0 0.0
    %65 = vmatpush1.msra.mxu0 0.0
    %66 = vmatprep.subr.mxu0 0.0
    %67 = vmatpush1.msra.mxu0 0.0
    %68 = vmatprep.subr.mxu0 0.0
    %69 = vmatpush1.msra.mxu0 0.0
    %70 = vmatprep.subr.mxu0 0.0
    %71 = vmatpush1.msra.mxu0 0.0
    %72 = vmatprep.subr.mxu0 0.0
    %73 = vmatpush1.msra.mxu0 0.0
    %74 = vmatprep.subr.mxu0 0.0
    %75 = vmatpush1.msra.mxu0 0.0
    %76 = vmatprep.subr.mxu0 0.0
    %77 = vmatpush1.msra.mxu0 0.0
    %78 = vmatprep.subr.mxu0 0.0
    %79 = vmatpush1.msra.mxu0 0.0
    %80 = vmatprep.subr.mxu0 0.0
    %81 = vmatpush1.msra.mxu0 0.0
    %82 = vmatprep.subr.mxu0 0.0
    %83 = vmatpush1.msra.mxu0 0.0
    %84 = vmatprep.subr.mxu0 0.0
    %85 = vmatpush1.msra.mxu0 0.0
    %86 = vmatprep.subr.mxu0 0.0
    %87 = vmatpush1.msra.mxu0 0.0
    %88 = vmatprep.subr.mxu0 0.0
    %89 = vmatpush1.msra.mxu0 0.0
    %90 = vmatprep.subr.mxu0 0.0
    %91 = vmatpush1.msra.mxu0 0.0
    %92 = vmatprep.subr.mxu0 0.0
    %93 = vmatpush1.msra.mxu0 0.0
    %94 = vmatprep.subr.mxu0 0.0
    %95 = vmatpush1.msra.mxu0 0.0
    %96 = vmatprep.subr.mxu0 0.0
    %97 = vmatpush1.msra.mxu0 0.0
    %98 = vmatprep.subr.mxu0 0.0
    %99 = vmatpush1.msra.mxu0 0.0
    %100 = vmatprep.subr.mxu0 0.0
    %101 = vmatpush1.msra.mxu0 0.0
    %102 = vmatprep.subr.mxu0 0.0
    %103 = vmatpush1.msra.mxu0 0.0
    %104 = vmatprep.subr.mxu0 0.0
    %105 = vmatpush1.msra.mxu0 0.0
    %106 = vmatprep.subr.mxu0 0.0
    %107 = vmatpush1.msra.mxu0 0.0
    %108 = vmatprep.subr.mxu0 0.0
    %109 = vmatpush1.msra.mxu0 0.0
    %110 = vmatprep.subr.mxu0 0.0
    %111 = vmatpush1.msra.mxu0 0.0
    %112 = vmatprep.subr.mxu0 0.0
    %113 = vmatpush1.msra.mxu0 0.0
    %114 = vmatprep.subr.mxu0 0.0
    %115 = vmatpush1.msra.mxu0 0.0
    %116 = vmatprep.mubr.f32.mxu0 0.0
    %117 = vmatmul.mubr.f32.gmra.mrb[0].mxu0 %v31
    %v118 = vpop.f32.mrb[0].mxu0
    %v119 = vadd.f32 %v27, %v118
    %v120 = vpop.f32.mrb[0].mxu0
    %121 = vmatprep.mubr.f32.mxu0 0.0
    %122 = vmatmul.mubr.f32.gmra.mrb[0].mxu0 %v34
    %v123 = vpop.f32.mrb[0].mxu0
    %v124 = vadd.f32 %v27, %v123
    %v125 = vpop.f32.mrb[0].mxu0
    %126 = vmatprep.mubr.f32.mxu0 0.0
    %127 = vmatmul.mubr.f32.gmra.mrb[0].mxu0 %v37
    %v128 = vpop.f32.mrb[0].mxu0
    %v129 = vadd.f32 %v27, %v128
    %v130 = vpop.f32.mrb[0].mxu0
    %131 = vmatprep.mubr.f32.mxu0 0.0
    %132 = vmatmul.mubr.f32.gmra.mrb[0].mxu0 %v40
    %v133 = vpop.f32.mrb[0].mxu0
    %v134 = vadd.f32 %v27, %v133
    %v135 = vpop.f32.mrb[0].mxu0
    %136 = vmatprep.mubr.f32.mxu0 0.0
    %137 = vmatmul.mubr.f32.gmra.mrb[0].mxu0 %v43
    %v138 = vpop.f32.mrb[0].mxu0
    %v139 = vadd.f32 %v27, %v138
    %v140 = vpop.f32.mrb[0].mxu0
    %141 = vmatprep.mubr.f32.mxu0 0.0
    %142 = vmatmul.mubr.f32.gmra.mrb[0].mxu0 %v46
    %v143 = vpop.f32.mrb[0].mxu0
    %v144 = vadd.f32 %v27, %v143
    %v145 = vpop.f32.mrb[0].mxu0
    %146 = vdwg.mxu0
    %vm147 = vcmask 523264
    %148 = vst.msk [vmem:[#allocation2] sm:$0xff] %vm147, %v119
    %149 = vst.msk [vmem:[#allocation2 + $0x8] sm:$0xff] %vm147, %v124
    %150 = vst.msk [vmem:[#allocation2 + $0x10] sm:$0xff] %vm147, %v129
    %151 = vst.msk [vmem:[#allocation2 + $0x18] sm:$0xff] %vm147, %v134
    %152 = vst.msk [vmem:[#allocation2 + $0x20] sm:$0xff] %vm147, %v139
    %153 = vst.msk [vmem:[#allocation2 + $0x28] sm:$0xff] %vm147, %v144
    // Predicated region
    $region14: #{tpu_custom_call.1} parent=1 // pred_check
      _
    $region15: #{tpu_custom_call.1} parent=1 // pred_check_branch
      %155 = sbr.rel (0) target = $region17
    $region16: #{tpu_custom_call.1} parent=1 // pred_region
      %s157 = ssub.s32 768, 768
      %158 = vsyncadd [#allocation3], %s157
      %s159 = sshll.u32 [#allocation2], 4
      %s160 = int_to_ptr.vmem [resolvable:$true] %s159
      %165 = dma.vmem_to_hbm [thread:$0]  %s160, 768, %s3, [#allocation3], 128, 128, 8
    $region17: #{tpu_custom_call.1} parent=1 // pred_fallthru
      _
    // Predicated region
    $region18: #{tpu_custom_call.1} parent=1 // pred_check
      _
    $region19: #{tpu_custom_call.1} parent=1 // pred_check_branch
      %167 = sbr.rel (0) target = $region21
    $region20: #{tpu_custom_call.1} parent=1 // pred_region
      %168 = dma.done [#allocation3], 768
    $region21: #{tpu_custom_call.1} parent=1 // pred_fallthru
      _
    %169 = vsyncpa [#allocation3], 1

</llo_original>
